<compile_context>
chip_gen: v7x
topology: tpu7x:2x2x1
jax: 0.10.0
libtpu: 0.0.40
codegen_flags: <defaults>
</compile_context>

<pallas_src>
import jax
import jax.numpy as jnp
from jax.experimental import pallas as pl
from jax.experimental.pallas import tpu as pltpu


# ----------------------------------------------------------------------------
# Tiling helpers
# ----------------------------------------------------------------------------
def _vmem_input_budget_bytes() -> int:
    """Per-generation budget for the double-buffered input tiles."""
    try:
        cap = int(pltpu.get_tpu_info().vmem_capacity_bytes)
    except Exception:  # conservative fallback if the query is unavailable
        cap = 64 << 20
    # v5e / v6e: 128 MiB VMEM -> ~48 MiB for input tiles.
    # v7x:        64 MiB VMEM -> ~24 MiB for input tiles.
    return (48 << 20) if cap >= (128 << 20) else (24 << 20)


def _pick_tile_rows(n, d, k_dom, itemsize, max_tile_rows=None):
    budget = _vmem_input_budget_bytes()
    denom = 2 * k_dom * d * itemsize          # double-buffered, K inputs
    max_tn = max(8, budget // denom)
    if max_tile_rows is not None:
        max_tn = min(max_tn, max_tile_rows)
    if n <= max_tn:
        return n                              # full dim as a single block (allowed)
    tn = (max_tn // 8) * 8
    # Prefer a tile that divides N exactly (no masked tail work at all).
    for cand in range(tn, 7, -8):
        if n % cand == 0:
            return cand
    return tn                                 # non-dividing -> tail step masks


# ----------------------------------------------------------------------------
# Pallas kernel: N-tiled per-domain sum + Gram-matrix pairwise linear-MMD
# ----------------------------------------------------------------------------
def _make_pairwise_mmd_kernel(k_dom, n_samples, tn, d):
    inv_n = 1.0 / float(n_samples)
    needs_mask = (n_samples % tn) != 0

    def kernel(*refs):
        feat_refs = refs[:k_dom]              # K x [TN, D] VMEM tiles
        adj_ref = refs[k_dom]                 # [K, K] output (resident across grid)
        acc_ref = refs[k_dom + 1]             # [K, D] f32 scratch accumulator

        step = pl.program_id(0)
        last = pl.num_programs(0) - 1

        @pl.when(step == 0)
        def _init():
            acc_ref[...] = jnp.zeros_like(acc_ref)

        # Per-domain partial sums over the sample axis of this chunk
        # (accumulate sums; divide by N exactly once in the finalize branch).
        def accumulate(apply_mask):
            def body():
                if apply_mask:
                    valid = n_samples - step * tn      # valid rows in tail chunk
                    row_ids = jax.lax.broadcasted_iota(jnp.int32, (tn, d), 0)
                    mask = row_ids < valid
                for ki in range(k_dom):
                    chunk = feat_refs[ki][...].astype(jnp.float32)     # [TN, D]
                    if apply_mask:
                        chunk = jnp.where(mask, chunk, 0.0)
                    psum = jnp.sum(chunk, axis=0, keepdims=True)       # [1, D]
                    acc_ref[ki:ki + 1, :] = acc_ref[ki:ki + 1, :] + psum
            return body

        if needs_mask:
            # Only the single remainder step pays for the iota/select masking.
            pl.when(step < last)(accumulate(False))
            pl.when(step == last)(accumulate(True))
        else:
            accumulate(False)()

        @pl.when(step == last)
        def _finalize():
            mu = acc_ref[...] * inv_n                             # [K, D] means
            # Gram form: ||mu_i - mu_j||^2 = |mu_i|^2 + |mu_j|^2 - 2 mu_i.mu_j
            g = jax.lax.dot_general(
                mu, mu, (((1,), (1,)), ((), ())),
                preferred_element_type=jnp.float32)               # [K, K] on MXU
            row = jax.lax.broadcasted_iota(jnp.int32, (k_dom, k_dom), 0)
            col = jax.lax.broadcasted_iota(jnp.int32, (k_dom, k_dom), 1)
            diag = jnp.where(row == col, g, 0.0)
            sq_i = jnp.sum(diag, axis=1, keepdims=True)           # [K, 1] = ||mu_i||^2
            sq_j = jnp.sum(diag, axis=0, keepdims=True)           # [1, K] = ||mu_j||^2
            dist = jnp.maximum(sq_i + sq_j - 2.0 * g, 0.0)        # clamp f32 cancellation
            adj_ref[...] = jnp.where(col > row, dist, 0.0)

    return kernel


def pairwise_mmd_adjacency(features, max_tile_rows=None) -> jax.Array:
    """features: list of K per-domain [N, D] arrays -> [K, K] adjacency."""
    k_dom = len(features)
    n, d = features[0].shape
    for f in features:
        if f.shape != (n, d):
            raise ValueError("All domains must share the same [N, D] shape.")
    itemsize = jnp.dtype(features[0].dtype).itemsize
    tn = _pick_tile_rows(n, d, k_dom, itemsize, max_tile_rows)
    n_steps = pl.cdiv(n, tn)

    kernel = _make_pairwise_mmd_kernel(k_dom, n, tn, d)

    in_specs = [pl.BlockSpec((tn, d), lambda i: (i, 0)) for _ in range(k_dom)]
    out_specs = pl.BlockSpec((k_dom, k_dom), lambda i: (0, 0))

    # Explicit scoped-VMEM bound: double-buffered inputs + scratch + output + slack.
    working_set = (2 * k_dom * tn * d * itemsize
                   + k_dom * d * 4
                   + 2 * k_dom * k_dom * 4)
    vmem_limit = int(working_set + (16 << 20))

    # Advisory cost hint: the kernel is a pure HBM-read reduction.
    cost = pl.CostEstimate(
        flops=int(k_dom * n * d + 2 * k_dom * k_dom * d + 4 * k_dom * k_dom),
        transcendentals=0,
        bytes_accessed=int(k_dom * n * d * itemsize + k_dom * k_dom * 4),
    )

    # TODO(synk): on v7x, split the N reduction across the 2 TensorCores
    # (leading size-2 "parallel" grid axis + [2, K, D] partial sums) for ~2x
    # effective read bandwidth; single-TC v5e/v6e gain nothing from it.
    return pl.pallas_call(
        kernel,
        out_shape=jax.ShapeDtypeStruct((k_dom, k_dom), jnp.float32),
        grid_spec=pltpu.PrefetchScalarGridSpec(
            num_scalar_prefetch=0,
            grid=(n_steps,),
            in_specs=in_specs,
            out_specs=out_specs,
            scratch_shapes=[pltpu.VMEM((k_dom, d), jnp.float32)],
        ),
        compiler_params=pltpu.CompilerParams(
            dimension_semantics=("arbitrary",),
            vmem_limit_bytes=vmem_limit,
        ),
        cost_estimate=cost,
    )(*features)


# ----------------------------------------------------------------------------
# Module wrapper reproducing the PyTorch forward semantics
# ----------------------------------------------------------------------------
class GraphBasedDomainDiscrepancy:
    def __init__(self, discrepancy: str = "mmd", keep_iterations: int = 10,
                 top_ratio: float = 0.5, decay_factor: float = 0.999,
                 min_top_ratio: float = 0.4, random_factor: float = 0.8):
        if discrepancy != "mmd":
            raise NotImplementedError
        self.keep_iterations = keep_iterations
        self.current_iteration = 0
        self.domain_pairs = None
        self._edge_index, self._edge_weight = None, None
        self.num_domains = None
        self.top_ratio = top_ratio
        self.decay_ratio = decay_factor
        self.min_top_ratio = min_top_ratio
        self.random_factor = random_factor

    def forward(self, feature: list, key: jax.Array):
        if self.num_domains is None:
            self.num_domains = len(feature)
        if len(feature) != self.num_domains:
            raise ValueError("Number of domains should be fixed.")

        if self.domain_pairs is None or self.current_iteration == self.keep_iterations:
            # ---- hot path: pairwise linear-MMD adjacency (Pallas kernel) ----
            # Per-domain arrays are passed straight through (no jnp.stack copy).
            feats = [jnp.asarray(f) for f in feature]
            adj = pairwise_mmd_adjacency(feats)                    # [K, K]

            # dense_to_sparse: row-major upper-triangular entries.
            # TODO(synk): torch_geometric.dense_to_sparse drops exact-zero
            # weights; here all i<j edges are kept (linear-MMD of distinct
            # domains is >0 a.s.), since dynamic nonzero has no static shape.
            rows, cols = jnp.triu_indices(self.num_domains, k=1)
            self._edge_index = jnp.stack([rows, cols]).astype(jnp.int32)   # [2, E]
            self._edge_weight = adj[rows, cols]                            # [E]

            self.current_iteration = 0
            self.top_ratio *= self.decay_ratio
            self.top_ratio = max(self.top_ratio, self.min_top_ratio)
        else:
            self.current_iteration += 1

        self.domain_pairs = self.get_domain_pairs(key, self.random_factor)
        return self.domain_pairs

    def get_domain_pairs(self, key, factor=0.4):
        e = self._edge_weight.shape[0]
        noise = jax.random.normal(key, (e,), dtype=jnp.float32)
        scored = self._edge_weight + noise * jnp.mean(self._edge_weight) * factor
        k = max(int(self.top_ratio * e), 1)
        _, top_idx = jax.lax.top_k(scored, k)
        return self._edge_index[:, top_idx]


# ----------------------------------------------------------------------------
def _reference_adj(feats):
    mus = jnp.stack([jnp.mean(f, axis=0) for f in feats])
    diff = mus[:, None, :] - mus[None, :, :]
    return jnp.triu(jnp.sum(diff * diff, axis=-1), k=1)


if __name__ == "__main__":
    key = jax.random.PRNGKey(0)
    # Lane-dense layout: D is a multiple of 128 so each row fills full vregs.
    K_DOMAINS, N_SAMPLES, HIDDEN = 4, 256, 128

    # deterministic synthetic per-domain features, list of [N, D] arrays
    features = [
        jax.random.normal(jax.random.fold_in(key, i), (N_SAMPLES, HIDDEN),
                          dtype=jnp.float32) + 0.5 * i
        for i in range(K_DOMAINS)
    ]

    # --- tiled kernel check vs pure-JAX reference (forces a 4-step grid) ---
    adj = jax.block_until_ready(pairwise_mmd_adjacency(features, max_tile_rows=64))
    ref = _reference_adj(features)
    assert jnp.allclose(adj, ref, rtol=1e-4, atol=1e-4)

    # --- default tiling (single full-extent block) ---
    adj1 = jax.block_until_ready(pairwise_mmd_adjacency(features))
    assert jnp.allclose(adj1, ref, rtol=1e-4, atol=1e-4)

    # --- ragged tail path: N=250 does not divide any 8-multiple tile <= 64 ---
    features_tail = [f[:250] for f in features]
    adj2 = jax.block_until_ready(
        pairwise_mmd_adjacency(features_tail, max_tile_rows=64))
    ref2 = _reference_adj(features_tail)
    assert jnp.allclose(adj2, ref2, rtol=1e-4, atol=1e-4)

    # --- full module forward ---
    model = GraphBasedDomainDiscrepancy()
    pairs = model.forward(features, key=jax.random.fold_in(key, 1234))
    pairs = jax.block_until_ready(pairs)

    # basic sanity on shapes: [2, k] with k = max(int(top_ratio * E), 1)
    n_edges = K_DOMAINS * (K_DOMAINS - 1) // 2
    assert pairs.shape[0] == 2 and 1 <= pairs.shape[1] <= n_edges

    print("KERNEL_OK")
</pallas_src>

<mosaic_0001>
module attributes {stable_mosaic.version = 11 : i64} {
  func.func @kernel(%arg0: i32, %arg1: memref<64x128xf32, #tpu.memory_space<vmem>>, %arg2: memref<64x128xf32, #tpu.memory_space<vmem>>, %arg3: memref<64x128xf32, #tpu.memory_space<vmem>>, %arg4: memref<64x128xf32, #tpu.memory_space<vmem>>, %arg5: memref<4x4xf32, #tpu.memory_space<vmem>>, %arg6: memref<4x128xf32, #tpu.memory_space<vmem>>) attributes {dimension_semantics = [#tpu.dimension_semantics<arbitrary>], iteration_bounds = array<i64: 4>, scalar_prefetch = 0 : i64, scratch_operands = 1 : i64, tpu.core_type = #tpu.core_type<tc>, window_params = [{transform_indices = @transform_0, window_bounds = array<i64: 64, 128>}, {transform_indices = @transform_1, window_bounds = array<i64: 64, 128>}, {transform_indices = @transform_2, window_bounds = array<i64: 64, 128>}, {transform_indices = @transform_3, window_bounds = array<i64: 64, 128>}, {pipeline_mode = #tpu.pipeline_mode<synchronous>, transform_indices = @transform_4, window_bounds = array<i64: 4, 4>}]} {
    %c0_i32 = arith.constant 0 : i32
    %0 = arith.cmpi eq, %arg0, %c0_i32 : i32
    %1 = arith.extui %0 : i1 to i32
    %c0_i32_0 = arith.constant 0 : i32
    %2 = arith.cmpi ne, %1, %c0_i32_0 : i32
    scf.if %2 {
      %cst_25 = arith.constant 0.000000e+00 : f32
      %30 = vector.broadcast %cst_25 : f32 to vector<4x128xf32>
      %c0_26 = arith.constant 0 : index
      %c0_27 = arith.constant 0 : index
      %31 = vector.load %arg6[%c0_26, %c0_27] : memref<4x128xf32, #tpu.memory_space<vmem>>, vector<4x128xf32>
      tpu.vector_store %arg6[%c0_26, %c0_27], %30 {strides = array<i32>} : memref<4x128xf32, #tpu.memory_space<vmem>>, vector<4x128xf32>,
    } else {
    }
    %c0 = arith.constant 0 : index
    %c0_1 = arith.constant 0 : index
    %3 = vector.load %arg1[%c0, %c0_1] : memref<64x128xf32, #tpu.memory_space<vmem>>, vector<64x128xf32>
    %cst = arith.constant dense<0.000000e+00> : vector<128xf32>
    %4 = vector.multi_reduction <add>, %3, %cst [0] : vector<64x128xf32> to vector<128xf32>
    %5 = vector.shape_cast %4 : vector<128xf32> to vector<1x128xf32>
    %c0_2 = arith.constant 0 : index
    %c0_3 = arith.constant 0 : index
    %6 = vector.load %arg6[%c0_2, %c0_3] : memref<4x128xf32, #tpu.memory_space<vmem>>, vector<1x128xf32>
    %7 = arith.addf %6, %5 : vector<1x128xf32>
    %c0_4 = arith.constant 0 : index
    %c0_5 = arith.constant 0 : index
    %8 = vector.load %arg6[%c0_4, %c0_5] : memref<4x128xf32, #tpu.memory_space<vmem>>, vector<1x128xf32>
    tpu.vector_store %arg6[%c0_4, %c0_5], %7 {strides = array<i32>} : memref<4x128xf32, #tpu.memory_space<vmem>>, vector<1x128xf32>,
    %c0_6 = arith.constant 0 : index
    %c0_7 = arith.constant 0 : index
    %9 = vector.load %arg2[%c0_6, %c0_7] : memref<64x128xf32, #tpu.memory_space<vmem>>, vector<64x128xf32>
    %cst_8 = arith.constant dense<0.000000e+00> : vector<128xf32>
    %10 = vector.multi_reduction <add>, %9, %cst_8 [0] : vector<64x128xf32> to vector<128xf32>
    %11 = vector.shape_cast %10 : vector<128xf32> to vector<1x128xf32>
    %c1 = arith.constant 1 : index
    %c0_9 = arith.constant 0 : index
    %12 = vector.load %arg6[%c1, %c0_9] : memref<4x128xf32, #tpu.memory_space<vmem>>, vector<1x128xf32>
    %13 = arith.addf %12, %11 : vector<1x128xf32>
    %c1_10 = arith.constant 1 : index
    %c0_11 = arith.constant 0 : index
    %14 = vector.load %arg6[%c1_10, %c0_11] : memref<4x128xf32, #tpu.memory_space<vmem>>, vector<1x128xf32>
    tpu.vector_store %arg6[%c1_10, %c0_11], %13 {strides = array<i32>} : memref<4x128xf32, #tpu.memory_space<vmem>>, vector<1x128xf32>,
    %c0_12 = arith.constant 0 : index
    %c0_13 = arith.constant 0 : index
    %15 = vector.load %arg3[%c0_12, %c0_13] : memref<64x128xf32, #tpu.memory_space<vmem>>, vector<64x128xf32>
    %cst_14 = arith.constant dense<0.000000e+00> : vector<128xf32>
    %16 = vector.multi_reduction <add>, %15, %cst_14 [0] : vector<64x128xf32> to vector<128xf32>
    %17 = vector.shape_cast %16 : vector<128xf32> to vector<1x128xf32>
    %c2 = arith.constant 2 : index
    %c0_15 = arith.constant 0 : index
    %18 = vector.load %arg6[%c2, %c0_15] : memref<4x128xf32, #tpu.memory_space<vmem>>, vector<1x128xf32>
    %19 = arith.addf %18, %17 : vector<1x128xf32>
    %c2_16 = arith.constant 2 : index
    %c0_17 = arith.constant 0 : index
    %20 = vector.load %arg6[%c2_16, %c0_17] : memref<4x128xf32, #tpu.memory_space<vmem>>, vector<1x128xf32>
    tpu.vector_store %arg6[%c2_16, %c0_17], %19 {strides = array<i32>} : memref<4x128xf32, #tpu.memory_space<vmem>>, vector<1x128xf32>,
    %c0_18 = arith.constant 0 : index
    %c0_19 = arith.constant 0 : index
    %21 = vector.load %arg4[%c0_18, %c0_19] : memref<64x128xf32, #tpu.memory_space<vmem>>, vector<64x128xf32>
    %cst_20 = arith.constant dense<0.000000e+00> : vector<128xf32>
    %22 = vector.multi_reduction <add>, %21, %cst_20 [0] : vector<64x128xf32> to vector<128xf32>
    %23 = vector.shape_cast %22 : vector<128xf32> to vector<1x128xf32>
    %c3 = arith.constant 3 : index
    %c0_21 = arith.constant 0 : index
    %24 = vector.load %arg6[%c3, %c0_21] : memref<4x128xf32, #tpu.memory_space<vmem>>, vector<1x128xf32>
    %25 = arith.addf %24, %23 : vector<1x128xf32>
    %c3_22 = arith.constant 3 : index
    %c0_23 = arith.constant 0 : index
    %26 = vector.load %arg6[%c3_22, %c0_23] : memref<4x128xf32, #tpu.memory_space<vmem>>, vector<1x128xf32>
    tpu.vector_store %arg6[%c3_22, %c0_23], %25 {strides = array<i32>} : memref<4x128xf32, #tpu.memory_space<vmem>>, vector<1x128xf32>,
    %c3_i32 = arith.constant 3 : i32
    %27 = arith.cmpi eq, %arg0, %c3_i32 : i32
    %28 = arith.extui %27 : i1 to i32
    %c0_i32_24 = arith.constant 0 : i32
    %29 = arith.cmpi ne, %28, %c0_i32_24 : i32
    scf.if %29 {
      %c0_25 = arith.constant 0 : index
      %c0_26 = arith.constant 0 : index
      %30 = vector.load %arg6[%c0_25, %c0_26] : memref<4x128xf32, #tpu.memory_space<vmem>>, vector<4x128xf32>
      %cst_27 = arith.constant 3.906250e-03 : f32
      %31 = vector.broadcast %cst_27 : f32 to vector<4x128xf32>
      %32 = arith.mulf %30, %31 : vector<4x128xf32>
      %cst_28 = arith.constant dense<0.000000e+00> : vector<4x4xf32>
      %33 = tpu.matmul %32, %32, %cst_28 {dimension_numbers = #tpu.dot_dimension_numbers<[1], [1], [0], [0], [0, 0, 1, 0], [], []>} : vector<4x128xf32>, vector<4x128xf32>, vector<4x4xf32> -> vector<4x4xf32>
      %34 = tpu.iota {dimensions = array<i32: 0>} : vector<4x4xi32>
      %35 = tpu.iota {dimensions = array<i32: 1>} : vector<4x4xi32>
      %36 = arith.cmpi eq, %34, %35 : vector<4x4xi32>
      %cst_29 = arith.constant 0.000000e+00 : f32
      %37 = vector.broadcast %cst_29 : f32 to vector<4x4xf32>
      %38 = arith.select %36, %33, %37 : vector<4x4xi1>, vector<4x4xf32>
      %cst_30 = arith.constant dense<0.000000e+00> : vector<4xf32>
      %39 = vector.multi_reduction <add>, %38, %cst_30 [1] : vector<4x4xf32> to vector<4xf32>
      %40 = vector.shape_cast %39 : vector<4xf32> to vector<4x1xf32>
      %cst_31 = arith.constant dense<0.000000e+00> : vector<4xf32>
      %41 = vector.multi_reduction <add>, %38, %cst_31 [0] : vector<4x4xf32> to vector<4xf32>
      %42 = vector.shape_cast %41 : vector<4xf32> to vector<1x4xf32>
      %43 = vector.broadcast %40 : vector<4x1xf32> to vector<4x4xf32>
      %44 = vector.broadcast %42 : vector<1x4xf32> to vector<4x4xf32>
      %45 = arith.addf %43, %44 : vector<4x4xf32>
      %cst_32 = arith.constant 2.000000e+00 : f32
      %46 = vector.broadcast %cst_32 : f32 to vector<4x4xf32>
      %47 = arith.mulf %46, %33 : vector<4x4xf32>
      %48 = arith.subf %45, %47 : vector<4x4xf32>
      %cst_33 = arith.constant 0.000000e+00 : f32
      %49 = vector.broadcast %cst_33 : f32 to vector<4x4xf32>
      %50 = arith.maximumf %48, %49 : vector<4x4xf32>
      %51 = arith.cmpi sgt, %35, %34 : vector<4x4xi32>
      %cst_34 = arith.constant 0.000000e+00 : f32
      %52 = vector.broadcast %cst_34 : f32 to vector<4x4xf32>
      %53 = arith.select %51, %50, %52 : vector<4x4xi1>, vector<4x4xf32>
      %c0_35 = arith.constant 0 : index
      %c0_36 = arith.constant 0 : index
      %54 = vector.load %arg5[%c0_35, %c0_36] : memref<4x4xf32, #tpu.memory_space<vmem>>, vector<4x4xf32>
      tpu.vector_store %arg5[%c0_35, %c0_36], %53 {strides = array<i32>} : memref<4x4xf32, #tpu.memory_space<vmem>>, vector<4x4xf32>,
    } else {
    }
    return
  }
  func.func @transform_0(%arg0: i32) -> (i32, i32) {
    %c0_i32 = arith.constant 0 : i32
    %c0_i32_0 = arith.constant 0 : i32
    return %arg0, %c0_i32 : i32, i32
  }
  func.func @transform_1(%arg0: i32) -> (i32, i32) {
    %c0_i32 = arith.constant 0 : i32
    %c0_i32_0 = arith.constant 0 : i32
    return %arg0, %c0_i32 : i32, i32
  }
  func.func @transform_2(%arg0: i32) -> (i32, i32) {
    %c0_i32 = arith.constant 0 : i32
    %c0_i32_0 = arith.constant 0 : i32
    return %arg0, %c0_i32 : i32, i32
  }
  func.func @transform_3(%arg0: i32) -> (i32, i32) {
    %c0_i32 = arith.constant 0 : i32
    %c0_i32_0 = arith.constant 0 : i32
    return %arg0, %c0_i32 : i32, i32
  }
  func.func @transform_4(%arg0: i32) -> (i32, i32) {
    %c0_i32 = arith.constant 0 : i32
    %c0_i32_0 = arith.constant 0 : i32
    %c0_i32_1 = arith.constant 0 : i32
    return %c0_i32, %c0_i32_0 : i32, i32
  }
}

</mosaic_0001>

<llo_original>
// kernel: tpu_custom_call.1
$region0: #{tpu_custom_call.1}
  #allocation0 [shape = 'u32[]', space=smem, size = 0x4, offset = 0x4, fixed_abs, tag = 'smem constant byte address 0x4 - core index']
  #allocation1 [shape = 'u32[144,128]{1,0:T(1,128)}', space=vmem, size = 0x12000, scoped, tag = 'internal scratch']
  #allocation2 [shape = 'f32[4,128]{1,0:T(4,128)}', space=vmem, size = 0x800, scoped, tag = 'scratch operand']
  %s0 = inlined_call_operand.hbm [shape: f32[256,128], index: 0, kind: input, shape index: {}]
  %s1 = inlined_call_operand.hbm [shape: f32[256,128], index: 1, kind: input, shape index: {}]
  %s2 = inlined_call_operand.hbm [shape: f32[256,128], index: 2, kind: input, shape index: {}]
  %s3 = inlined_call_operand.hbm [shape: f32[256,128], index: 3, kind: input, shape index: {}]
  %s4 = inlined_call_operand.hbm [shape: f32[4,4], index: 4, kind: output, shape index: {}]
  %s5 = sld [smem:[#allocation0]]
  $region73: #{tpu_custom_call.1} parent=0
    _
  %s7 = ssub.s32 1, %s5
  %s8 = scalar_select 0, %s7, %s5
  $region1: #{tpu_custom_call.1} parent=0
    #allocation3 [shape = 'u8[65536]{0}', space=vmem, size = 0x10000, scoped, tag = 'input window, operand 0']
    #allocation4 [shape = 's32[2]{0}', space=sflag, size = 0x8, scoped, tag = 'scoped memory for tpu_custom_call.1']
    #allocation5 [shape = 's32[2]{0}', space=sflag, size = 0x8, scoped, tag = 'scoped memory for tpu_custom_call.1']
    #allocation6 [shape = 'u8[65536]{0}', space=vmem, size = 0x10000, scoped, tag = 'input window, operand 1']
    #allocation7 [shape = 's32[2]{0}', space=sflag, size = 0x8, scoped, tag = 'scoped memory for tpu_custom_call.1']
    #allocation8 [shape = 'u8[65536]{0}', space=vmem, size = 0x10000, scoped, tag = 'input window, operand 2']
    #allocation9 [shape = 'u8[65536]{0}', space=vmem, size = 0x10000, scoped, tag = 'input window, operand 3']
    #allocation10 [shape = 's32[2]{0}', space=sflag, size = 0x8, scoped, tag = 'scoped memory for tpu_custom_call.1']
    #allocation11 [shape = 'u8[2048]{0}', space=vmem, size = 0x800, scoped, tag = 'output window, operand 0, single buffered']
    %9 = vsyncpa [#allocation4], 0
    %s10 = scalar_lea.sflag [#allocation4], 1
    %11 = vsyncpa %s10, 0
    %12 = vsyncpa [#allocation7], 0
    %s13 = scalar_lea.sflag [#allocation7], 1
    %14 = vsyncpa %s13, 0
    %15 = vsyncpa [#allocation10], 0
    %s16 = scalar_lea.sflag [#allocation10], 1
    %17 = vsyncpa %s16, 0
    %18 = vsyncpa [#allocation5], 0
    loop: start=0, step=1, limit=6
    $region2: #{tpu_custom_call.1} parent=1 // loop_pre_header
      _
    $region3: #{tpu_custom_call.1} parent=1 // loop_header
      %s20 = sphi 0, %s24
      %p21 = scmp.ge.s32.totalorder %s20, 6
      %s30 = sphi 0, %s32
      %s33 = sphi 0, %s30
      %s34 = sphi 0, %s33
      %s50 = sphi 0, %s34
      %s56 = sphi 0, %s58
      %s59 = sphi 0, %s56
      %s60 = sphi 0, %s59
      %s76 = sphi 0, %s60
      %s82 = sphi 0, %s84
      %s85 = sphi 0, %s82
      %s86 = sphi 0, %s85
      %s102 = sphi 0, %s86
      %s108 = sphi 0, %s110
      %s111 = sphi 0, %s108
      %s112 = sphi 0, %s111
      %s128 = sphi 0, %s112
      %s132 = sphi 0, %s132
      %s134 = sphi 0, %s132
      %s135 = sphi 0, %s134
      %s149 = sphi 0, %s135
    $region4: #{tpu_custom_call.1} parent=1 // loop_header_branch
      %23 = sbr.rel (%p21) target = $region8
    $region5: #{tpu_custom_call.1} parent=1 // loop_body
      %s25 = ssub.s32 %s20, 1
      %s26 = ssub.s32 %s20, 2
      %s27 = sadd.s32 %s20, 1
      %s28 = ssub.s32 %s20, %s27
      %p29 = scmp.eq.s32.totalorder %s28, 0
      %s31 = sadd.s32 %s30, 1
      %s32 = scalar_select %p29, %s30, %s31
      %p35 = pneg %p29
      %p36 = scmp.eq.s32.totalorder %s20, 3
      %p37 = por %p35, %p36
      %p38 = scmp.ne.s32.totalorder %s30, %s33
      %p39 = scmp.eq.s32.totalorder %s20, 0
      %p40 = por %p38, %p39
      %p41 = scmp.ne.s32.totalorder %s30, %s33
      %p42 = scmp.eq.s32.totalorder %s25, 3
      %p43 = por %p41, %p42
      %p44 = scmp.ne.s32.totalorder %s33, %s34
      %p45 = scmp.eq.s32.totalorder %s25, 0
      %p46 = por %p44, %p45
      %p47 = scmp.ne.s32.totalorder %s33, %s34
      %p48 = scmp.eq.s32.totalorder %s26, 3
      %p49 = por %p47, %p48
      %p51 = scmp.ne.s32.totalorder %s34, %s50
      %p52 = scmp.eq.s32.totalorder %s26, 0
      %p53 = por %p51, %p52
      %s54 = ssub.s32 %s20, %s27
      %p55 = scmp.eq.s32.totalorder %s54, 0
      %s57 = sadd.s32 %s56, 1
      %s58 = scalar_select %p55, %s56, %s57
      %p61 = pneg %p55
      %p62 = scmp.eq.s32.totalorder %s20, 3
      %p63 = por %p61, %p62
      %p64 = scmp.ne.s32.totalorder %s56, %s59
      %p65 = scmp.eq.s32.totalorder %s20, 0
      %p66 = por %p64, %p65
      %p67 = scmp.ne.s32.totalorder %s56, %s59
      %p68 = scmp.eq.s32.totalorder %s25, 3
      %p69 = por %p67, %p68
      %p70 = scmp.ne.s32.totalorder %s59, %s60
      %p71 = scmp.eq.s32.totalorder %s25, 0
      %p72 = por %p70, %p71
      %p73 = scmp.ne.s32.totalorder %s59, %s60
      %p74 = scmp.eq.s32.totalorder %s26, 3
      %p75 = por %p73, %p74
      %p77 = scmp.ne.s32.totalorder %s60, %s76
      %p78 = scmp.eq.s32.totalorder %s26, 0
      %p79 = por %p77, %p78
      %s80 = ssub.s32 %s20, %s27
      %p81 = scmp.eq.s32.totalorder %s80, 0
      %s83 = sadd.s32 %s82, 1
      %s84 = scalar_select %p81, %s82, %s83
      %p87 = pneg %p81
      %p88 = scmp.eq.s32.totalorder %s20, 3
      %p89 = por %p87, %p88
      %p90 = scmp.ne.s32.totalorder %s82, %s85
      %p91 = scmp.eq.s32.totalorder %s20, 0
      %p92 = por %p90, %p91
      %p93 = scmp.ne.s32.totalorder %s82, %s85
      %p94 = scmp.eq.s32.totalorder %s25, 3
      %p95 = por %p93, %p94
      %p96 = scmp.ne.s32.totalorder %s85, %s86
      %p97 = scmp.eq.s32.totalorder %s25, 0
      %p98 = por %p96, %p97
      %p99 = scmp.ne.s32.totalorder %s85, %s86
      %p100 = scmp.eq.s32.totalorder %s26, 3
      %p101 = por %p99, %p100
      %p103 = scmp.ne.s32.totalorder %s86, %s102
      %p104 = scmp.eq.s32.totalorder %s26, 0
      %p105 = por %p103, %p104
      %s106 = ssub.s32 %s20, %s27
      %p107 = scmp.eq.s32.totalorder %s106, 0
      %s109 = sadd.s32 %s108, 1
      %s110 = scalar_select %p107, %s108, %s109
      %p113 = pneg %p107
      %p114 = scmp.eq.s32.totalorder %s20, 3
      %p115 = por %p113, %p114
      %p116 = scmp.ne.s32.totalorder %s108, %s111
      %p117 = scmp.eq.s32.totalorder %s20, 0
      %p118 = por %p116, %p117
      %p119 = scmp.ne.s32.totalorder %s108, %s111
      %p120 = scmp.eq.s32.totalorder %s25, 3
      %p121 = por %p119, %p120
      %p122 = scmp.ne.s32.totalorder %s111, %s112
      %p123 = scmp.eq.s32.totalorder %s25, 0
      %p124 = por %p122, %p123
      %p125 = scmp.ne.s32.totalorder %s111, %s112
      %p126 = scmp.eq.s32.totalorder %s26, 3
      %p127 = por %p125, %p126
      %p129 = scmp.ne.s32.totalorder %s112, %s128
      %p130 = scmp.eq.s32.totalorder %s26, 0
      %p131 = por %p129, %p130
      %s133 = sadd.s32 %s132, 1
      %p136 = scmp.eq.s32.totalorder %s20, 3
      %p137 = scmp.ne.s32.totalorder %s132, %s134
      %p138 = scmp.eq.s32.totalorder %s20, 0
      %p139 = por %p137, %p138
      %p140 = scmp.ne.s32.totalorder %s132, %s134
      %p141 = scmp.eq.s32.totalorder %s25, 3
      %p142 = por %p140, %p141
      %p143 = scmp.ne.s32.totalorder %s134, %s135
      %p144 = scmp.eq.s32.totalorder %s25, 0
      %p145 = por %p143, %p144
      %p146 = scmp.ne.s32.totalorder %s134, %s135
      %p147 = scmp.eq.s32.totalorder %s26, 3
      %p148 = por %p146, %p147
      %p150 = scmp.ne.s32.totalorder %s135, %s149
      %p151 = scmp.eq.s32.totalorder %s26, 0
      %p152 = por %p150, %p151
      %p153 = scmp.le.s32.totalorder 1, %s20
      %p154 = scmp.lt.s32.totalorder %s20, 5
      %p155 = pnand %p153, %p154
      %p156 = pneg %p155
      // Predicated region
      $region9: #{tpu_custom_call.1} parent=5 // pred_check
        _
      $region10: #{tpu_custom_call.1} parent=5 // pred_check_branch
        %158 = sbr.rel (%p155) target = $region12
      $region11: #{tpu_custom_call.1} parent=5 // pred_region
        %s159 = ssub.s32 %s20, 1
      $region12: #{tpu_custom_call.1} parent=5 // pred_fallthru
        _
      %p160 = scmp.lt.s32.totalorder %s20, 4
      // Predicated region
      $region13: #{tpu_custom_call.1} parent=5 // pred_check
        %p161 = pneg %p160
      $region14: #{tpu_custom_call.1} parent=5 // pred_check_branch
        %163 = sbr.rel (%p161) target = $region16
      $region15: #{tpu_custom_call.1} parent=5 // pred_region
        // Predicated region
        $region17: #{tpu_custom_call.1} parent=15 // pred_check
          %p164 = pneg %p40
        $region18: #{tpu_custom_call.1} parent=15 // pred_check_branch
          %166 = sbr.rel (%p164) target = $region20
        $region19: #{tpu_custom_call.1} parent=15 // pred_region
          %s167 = sand.u32 %s30, 1
          %s168 = scalar_lea.sflag [#allocation4], %s167
          %s169 = sand.u32 %s30, 1
          %s170 = smul.addr %s169, 64
          %s171 = scalar_lea.vmem [#allocation3], %s170
          %s172 = smul.u32 8, %s20
          %s174 = ssub.s32 1024, 1024
          %175 = vsyncadd %s168, %s174
          %s176 = smul.addr %s172, 128
          %s177 = scalar_lea.hbm %s0, %s176
          %s178 = sshll.u32 %s171, 4
          %s179 = int_to_ptr.vmem [resolvable:$true] %s178
          %184 = dma.hbm_to_vmem [thread:$0]  %s177, 1024, %s179, %s168, 128, 128, 8
        $region20: #{tpu_custom_call.1} parent=15 // pred_fallthru
          _
        // Predicated region
        $region21: #{tpu_custom_call.1} parent=15 // pred_check
          %p185 = pneg %p66
        $region22: #{tpu_custom_call.1} parent=15 // pred_check_branch
          %187 = sbr.rel (%p185) target = $region24
        $region23: #{tpu_custom_call.1} parent=15 // pred_region
          %s188 = sand.u32 %s20, 1
          %s189 = scalar_lea.sflag [#allocation7], %s188
          %s190 = sand.u32 %s56, 1
          %s191 = smul.addr %s190, 64
          %s192 = scalar_lea.vmem [#allocation6], %s191
          %s193 = smul.u32 8, %s20
          %s195 = ssub.s32 1024, 1024
          %196 = vsyncadd %s189, %s195
          %s197 = smul.addr %s193, 128
          %s198 = scalar_lea.hbm %s1, %s197
          %s199 = sshll.u32 %s192, 4
          %s200 = int_to_ptr.vmem [resolvable:$true] %s199
          %205 = dma.hbm_to_vmem [thread:$0]  %s198, 1024, %s200, %s189, 128, 128, 8
        $region24: #{tpu_custom_call.1} parent=15 // pred_fallthru
          _
        // Predicated region
        $region25: #{tpu_custom_call.1} parent=15 // pred_check
          %p206 = pneg %p92
        $region26: #{tpu_custom_call.1} parent=15 // pred_check_branch
          %208 = sbr.rel (%p206) target = $region28
        $region27: #{tpu_custom_call.1} parent=15 // pred_region
          %s209 = sand.u32 %s20, 1
          %s210 = scalar_lea.sflag [#allocation7], %s209
          %s211 = sand.u32 %s82, 1
          %s212 = smul.addr %s211, 64
          %s213 = scalar_lea.vmem [#allocation8], %s212
          %s214 = smul.u32 8, %s20
          %s216 = ssub.s32 1024, 1024
          %217 = vsyncadd %s210, %s216
          %s218 = smul.addr %s214, 128
          %s219 = scalar_lea.hbm %s2, %s218
          %s220 = sshll.u32 %s213, 4
          %s221 = int_to_ptr.vmem [resolvable:$true] %s220
          %226 = dma.hbm_to_vmem [thread:$0]  %s219, 1024, %s221, %s210, 128, 128, 8
        $region28: #{tpu_custom_call.1} parent=15 // pred_fallthru
          _
        // Predicated region
        $region29: #{tpu_custom_call.1} parent=15 // pred_check
          %p227 = pneg %p118
        $region30: #{tpu_custom_call.1} parent=15 // pred_check_branch
          %229 = sbr.rel (%p227) target = $region32
        $region31: #{tpu_custom_call.1} parent=15 // pred_region
          %s230 = sand.u32 %s108, 1
          %s231 = scalar_lea.sflag [#allocation10], %s230
          %s232 = sand.u32 %s108, 1
          %s233 = smul.addr %s232, 64
          %s234 = scalar_lea.vmem [#allocation9], %s233
          %s235 = smul.u32 8, %s20
          %s237 = ssub.s32 1024, 1024
          %238 = vsyncadd %s231, %s237
          %s239 = smul.addr %s235, 128
          %s240 = scalar_lea.hbm %s3, %s239
          %s241 = sshll.u32 %s234, 4
          %s242 = int_to_ptr.vmem [resolvable:$true] %s241
          %247 = dma.hbm_to_vmem [thread:$0]  %s240, 1024, %s242, %s231, 128, 128, 8
        $region32: #{tpu_custom_call.1} parent=15 // pred_fallthru
          _
      $region16: #{tpu_custom_call.1} parent=5 // pred_fallthru
        _
      %p248 = scmp.le.s32.totalorder 1, %s20
      %p249 = scmp.lt.s32.totalorder %s20, 5
      %p250 = pnand %p248, %p249
      %p251 = pneg %p250
      // Predicated region
      $region33: #{tpu_custom_call.1} parent=5 // pred_check
        _
      $region34: #{tpu_custom_call.1} parent=5 // pred_check_branch
        %253 = sbr.rel (%p250) target = $region36
      $region35: #{tpu_custom_call.1} parent=5 // pred_region
        %s254 = ssub.s32 %s20, 1
        %s255 = sand.u32 %s33, 1
        %s256 = scalar_lea.sflag [#allocation4], %s255
        %s257 = sand.u32 %s33, 1
        %s258 = smul.addr %s257, 64
        %s259 = scalar_lea.vmem [#allocation3], %s258
        // Predicated region
        $region37: #{tpu_custom_call.1} parent=35 // pred_check
          %p260 = pneg %p46
        $region38: #{tpu_custom_call.1} parent=35 // pred_check_branch
          %262 = sbr.rel (%p260) target = $region40
        $region39: #{tpu_custom_call.1} parent=35 // pred_region
          %263 = dma.done %s256, 1024
        $region40: #{tpu_custom_call.1} parent=35 // pred_fallthru
          _
        %s264 = sand.u32 %s25, 1
        %s265 = scalar_lea.sflag [#allocation7], %s264
        %s266 = sand.u32 %s59, 1
        %s267 = smul.addr %s266, 64
        %s268 = scalar_lea.vmem [#allocation6], %s267
        // Predicated region
        $region41: #{tpu_custom_call.1} parent=35 // pred_check
          %p269 = pneg %p72
        $region42: #{tpu_custom_call.1} parent=35 // pred_check_branch
          %271 = sbr.rel (%p269) target = $region44
        $region43: #{tpu_custom_call.1} parent=35 // pred_region
          %272 = dma.done %s265, 1024
        $region44: #{tpu_custom_call.1} parent=35 // pred_fallthru
          _
        %s273 = sand.u32 %s25, 1
        %s274 = scalar_lea.sflag [#allocation7], %s273
        %s275 = sand.u32 %s85, 1
        %s276 = smul.addr %s275, 64
        %s277 = scalar_lea.vmem [#allocation8], %s276
        // Predicated region
        $region45: #{tpu_custom_call.1} parent=35 // pred_check
          %p278 = pneg %p98
        $region46: #{tpu_custom_call.1} parent=35 // pred_check_branch
          %280 = sbr.rel (%p278) target = $region48
        $region47: #{tpu_custom_call.1} parent=35 // pred_region
          %281 = dma.done %s274, 1024
        $region48: #{tpu_custom_call.1} parent=35 // pred_fallthru
          _
        %s282 = sand.u32 %s111, 1
        %s283 = scalar_lea.sflag [#allocation10], %s282
        %s284 = sand.u32 %s111, 1
        %s285 = smul.addr %s284, 64
        %s286 = scalar_lea.vmem [#allocation9], %s285
        // Predicated region
        $region49: #{tpu_custom_call.1} parent=35 // pred_check
          %p287 = pneg %p124
        $region50: #{tpu_custom_call.1} parent=35 // pred_check_branch
          %289 = sbr.rel (%p287) target = $region52
        $region51: #{tpu_custom_call.1} parent=35 // pred_region
          %290 = dma.done %s283, 1024
        $region52: #{tpu_custom_call.1} parent=35 // pred_fallthru
          _
        %s291 = sand.u32 %s33, 1
        %s292 = scalar_lea.sflag [#allocation4], %s291
        %s293 = sand.u32 %s33, 1
        %s294 = smul.addr %s293, 64
        %s295 = scalar_lea.vmem [#allocation3], %s294
        %p296 = pneg %p46
        %p297 = pneg %p43
        %s298 = sand.u32 %s25, 1
        %s299 = scalar_lea.sflag [#allocation7], %s298
        %s300 = sand.u32 %s59, 1
        %s301 = smul.addr %s300, 64
        %s302 = scalar_lea.vmem [#allocation6], %s301
        %p303 = pneg %p72
        %p304 = pneg %p69
        %s305 = sand.u32 %s25, 1
        %s306 = scalar_lea.sflag [#allocation7], %s305
        %s307 = sand.u32 %s85, 1
        %s308 = smul.addr %s307, 64
        %s309 = scalar_lea.vmem [#allocation8], %s308
        %p310 = pneg %p98
        %p311 = pneg %p95
        %s312 = sand.u32 %s111, 1
        %s313 = scalar_lea.sflag [#allocation10], %s312
        %s314 = sand.u32 %s111, 1
        %s315 = smul.addr %s314, 64
        %s316 = scalar_lea.vmem [#allocation9], %s315
        %p317 = pneg %p124
        %p318 = pneg %p121
        %p319 = pneg %p145
        %p320 = pneg %p142
        %s321 = smul.u32 8, %s25
        %s322 = smul.u32 8, %s25
        %s323 = smul.u32 8, %s25
        %s324 = smul.u32 8, %s25
        %p325 = scmp.eq.s32.totalorder %s25, 0
        // Predicated region
        $region53: #{tpu_custom_call.1} parent=35 // pred_check
          %p326 = pneg %p325
        $region54: #{tpu_custom_call.1} parent=35 // pred_check_branch
          %328 = sbr.rel (%p326) target = $region56
        $region55: #{tpu_custom_call.1} parent=35 // pred_region
          %329 = vst [vmem:[#allocation2] sm:$0xf] 0.0
        $region56: #{tpu_custom_call.1} parent=35 // pred_fallthru
          _
        %v330 = vld [vmem:[%s259] sm:$0xff]
        %v331 = vld [vmem:[%s259 + $0x8] sm:$0xff]
        %v332 = vld [vmem:[%s259 + $0x10] sm:$0xff]
        %v333 = vld [vmem:[%s259 + $0x18] sm:$0xff]
        %v334 = vld [vmem:[%s259 + $0x20] sm:$0xff]
        %v335 = vld [vmem:[%s259 + $0x28] sm:$0xff]
        %v336 = vld [vmem:[%s259 + $0x30] sm:$0xff]
        %v337 = vld [vmem:[%s259 + $0x38] sm:$0xff]
        %v338 = vadd.f32 %v330, %v331
        %v339 = vadd.f32 %v338, %v332
        %v340 = vadd.f32 %v339, %v333
        %v341 = vadd.f32 %v340, %v334
        %v342 = vadd.f32 %v341, %v335
        %v343 = vadd.f32 %v342, %v336
        %v344 = vadd.f32 %v343, %v337
        %v345 = vrot.slane %v344, 4
        %v346 = vadd.f32 %v344, %v345
        %v347 = vrot.slane %v346, 2
        %v348 = vadd.f32 %v346, %v347
        %v349 = vrot.slane %v348, 1
        %v350 = vadd.f32 %v348, %v349
        %v351 = vld [vmem:[#allocation2] sm:$0x1]
        %v352 = vadd.f32 %v351, %v350
        %353 = vst [vmem:[#allocation2] sm:$0x1] %v352
        %v354 = vld [vmem:[%s268] sm:$0xff]
        %v355 = vld [vmem:[%s268 + $0x8] sm:$0xff]
        %v356 = vld [vmem:[%s268 + $0x10] sm:$0xff]
        %v357 = vld [vmem:[%s268 + $0x18] sm:$0xff]
        %v358 = vld [vmem:[%s268 + $0x20] sm:$0xff]
        %v359 = vld [vmem:[%s268 + $0x28] sm:$0xff]
        %v360 = vld [vmem:[%s268 + $0x30] sm:$0xff]
        %v361 = vld [vmem:[%s268 + $0x38] sm:$0xff]
        %v362 = vadd.f32 %v354, %v355
        %v363 = vadd.f32 %v362, %v356
        %v364 = vadd.f32 %v363, %v357
        %v365 = vadd.f32 %v364, %v358
        %v366 = vadd.f32 %v365, %v359
        %v367 = vadd.f32 %v366, %v360
        %v368 = vadd.f32 %v367, %v361
        %v369 = vrot.slane %v368, 4
        %v370 = vadd.f32 %v368, %v369
        %v371 = vrot.slane %v370, 2
        %v372 = vadd.f32 %v370, %v371
        %v373 = vrot.slane %v372, 1
        %v374 = vadd.f32 %v372, %v373
        %v375 = vld [vmem:[#allocation2 + $0x1] sm:$0x1]
        %v376 = vadd.f32 %v375, %v374
        %377 = vst [vmem:[#allocation2 + $0x1] sm:$0x1] %v376
        %v378 = vld [vmem:[%s277] sm:$0xff]
        %v379 = vld [vmem:[%s277 + $0x8] sm:$0xff]
        %v380 = vld [vmem:[%s277 + $0x10] sm:$0xff]
        %v381 = vld [vmem:[%s277 + $0x18] sm:$0xff]
        %v382 = vld [vmem:[%s277 + $0x20] sm:$0xff]
        %v383 = vld [vmem:[%s277 + $0x28] sm:$0xff]
        %v384 = vld [vmem:[%s277 + $0x30] sm:$0xff]
        %v385 = vld [vmem:[%s277 + $0x38] sm:$0xff]
        %v386 = vadd.f32 %v378, %v379
        %v387 = vadd.f32 %v386, %v380
        %v388 = vadd.f32 %v387, %v381
        %v389 = vadd.f32 %v388, %v382
        %v390 = vadd.f32 %v389, %v383
        %v391 = vadd.f32 %v390, %v384
        %v392 = vadd.f32 %v391, %v385
        %v393 = vrot.slane %v392, 4
        %v394 = vadd.f32 %v392, %v393
        %v395 = vrot.slane %v394, 2
        %v396 = vadd.f32 %v394, %v395
        %v397 = vrot.slane %v396, 1
        %v398 = vadd.f32 %v396, %v397
        %v399 = vld [vmem:[#allocation2 + $0x2] sm:$0x1]
        %v400 = vadd.f32 %v399, %v398
        %401 = vst [vmem:[#allocation2 + $0x2] sm:$0x1] %v400
        %v402 = vld [vmem:[%s286] sm:$0xff]
        %v403 = vld [vmem:[%s286 + $0x8] sm:$0xff]
        %v404 = vld [vmem:[%s286 + $0x10] sm:$0xff]
        %v405 = vld [vmem:[%s286 + $0x18] sm:$0xff]
        %v406 = vld [vmem:[%s286 + $0x20] sm:$0xff]
        %v407 = vld [vmem:[%s286 + $0x28] sm:$0xff]
        %v408 = vld [vmem:[%s286 + $0x30] sm:$0xff]
        %v409 = vld [vmem:[%s286 + $0x38] sm:$0xff]
        %v410 = vadd.f32 %v402, %v403
        %v411 = vadd.f32 %v410, %v404
        %v412 = vadd.f32 %v411, %v405
        %v413 = vadd.f32 %v412, %v406
        %v414 = vadd.f32 %v413, %v407
        %v415 = vadd.f32 %v414, %v408
        %v416 = vadd.f32 %v415, %v409
        %v417 = vrot.slane %v416, 4
        %v418 = vadd.f32 %v416, %v417
        %v419 = vrot.slane %v418, 2
        %v420 = vadd.f32 %v418, %v419
        %v421 = vrot.slane %v420, 1
        %v422 = vadd.f32 %v420, %v421
        %v423 = vld [vmem:[#allocation2 + $0x3] sm:$0x1]
        %v424 = vadd.f32 %v423, %v422
        %425 = vst [vmem:[#allocation2 + $0x3] sm:$0x1] %v424
        %p426 = scmp.eq.s32.totalorder %s25, 3
        // Predicated region
        $region57: #{tpu_custom_call.1} parent=35 // pred_check
          %p427 = pneg %p426
        $region58: #{tpu_custom_call.1} parent=35 // pred_check_branch
          %429 = sbr.rel (%p427) target = $region60
        $region59: #{tpu_custom_call.1} parent=35 // pred_region
          %v430 = vld [vmem:[#allocation2] sm:$0xf]
          %v431 = vmul.f32 %v430, 0.00390625
          %432 = vmatprep.subr.mxu0 0.0
          %433 = vmatpush1.xpose.msra.mxu0 %v431
          %434 = vmatprep.subr.mxu0 0.0
          %435 = vmatpush1.xpose.msra.mxu0 0.0
          %436 = vmatprep.subr.mxu0 0.0
          %437 = vmatpush1.xpose.msra.mxu0 0.0
          %438 = vmatprep.subr.mxu0 0.0
          %439 = vmatpush1.xpose.msra.mxu0 0.0
          %440 = vmatprep.subr.mxu0 0.0
          %441 = vmatpush1.xpose.msra.mxu0 0.0
          %442 = vmatprep.subr.mxu0 0.0
          %443 = vmatpush1.xpose.msra.mxu0 0.0
          %444 = vmatprep.subr.mxu0 0.0
          %445 = vmatpush1.xpose.msra.mxu0 0.0
          %446 = vmatprep.subr.mxu0 0.0
          %447 = vmatpush1.xpose.msra.mxu0 0.0
          %448 = vmatprep.subr.mxu0 0.0
          %449 = vmatpush1.xpose.msra.mxu0 0.0
          %450 = vmatprep.subr.mxu0 0.0
          %451 = vmatpush1.xpose.msra.mxu0 0.0
          %452 = vmatprep.subr.mxu0 0.0
          %453 = vmatpush1.xpose.msra.mxu0 0.0
          %454 = vmatprep.subr.mxu0 0.0
          %455 = vmatpush1.xpose.msra.mxu0 0.0
          %456 = vmatprep.subr.mxu0 0.0
          %457 = vmatpush1.xpose.msra.mxu0 0.0
          %458 = vmatprep.subr.mxu0 0.0
          %459 = vmatpush1.xpose.msra.mxu0 0.0
          %460 = vmatprep.subr.mxu0 0.0
          %461 = vmatpush1.xpose.msra.mxu0 0.0
          %462 = vmatprep.subr.mxu0 0.0
          %463 = vmatpush1.xpose.msra.mxu0 0.0
          %464 = vmatprep.subr.mxu0 0.0
          %465 = vmatpush1.xpose.msra.mxu0 0.0
          %466 = vmatprep.subr.mxu0 0.0
          %467 = vmatpush1.xpose.msra.mxu0 0.0
          %468 = vmatprep.subr.mxu0 0.0
          %469 = vmatpush1.xpose.msra.mxu0 0.0
          %470 = vmatprep.subr.mxu0 0.0
          %471 = vmatpush1.xpose.msra.mxu0 0.0
          %472 = vmatprep.subr.mxu0 0.0
          %473 = vmatpush1.xpose.msra.mxu0 0.0
          %474 = vmatprep.subr.mxu0 0.0
          %475 = vmatpush1.xpose.msra.mxu0 0.0
          %476 = vmatprep.subr.mxu0 0.0
          %477 = vmatpush1.xpose.msra.mxu0 0.0
          %478 = vmatprep.subr.mxu0 0.0
          %479 = vmatpush1.xpose.msra.mxu0 0.0
          %480 = vmatprep.subr.mxu0 0.0
          %481 = vmatpush1.xpose.msra.mxu0 0.0
          %482 = vmatprep.subr.mxu0 0.0
          %483 = vmatpush1.xpose.msra.mxu0 0.0
          %484 = vmatprep.subr.mxu0 0.0
          %485 = vmatpush1.xpose.msra.mxu0 0.0
          %486 = vmatprep.subr.mxu0 0.0
          %487 = vmatpush1.xpose.msra.mxu0 0.0
          %488 = vmatprep.subr.mxu0 0.0
          %489 = vmatpush1.xpose.msra.mxu0 0.0
          %490 = vmatprep.subr.mxu0 0.0
          %491 = vmatpush1.xpose.msra.mxu0 0.0
          %492 = vmatprep.subr.mxu0 0.0
          %493 = vmatpush1.xpose.msra.mxu0 0.0
          %494 = vmatprep.subr.mxu0 0.0
          %495 = vmatpush1.xpose.msra.mxu0 0.0
          %496 = vmatprep.mubr.f32.mxu0 0.0
          %497 = vmatmul.mubr.f32.gmra.mrb[0].mxu0 %v431
          %v498 = vpop.f32.mrb[0].mxu0
          %v499 = vadd.f32 0.0, %v498
          %v500 = vpop.f32.mrb[0].mxu0
          %501 = vdwg.mxu0
          %v502 = vlaneseq
          %v503 = vshrl.u32 %v502, 7
          %v504 = vlaneseq
          %v505 = vand.u32 %v504, 127
          %vm506 = vcmp.eq.s32.totalorder %v503, %v505
          %v507 = vsel %vm506, %v499, 0.0
          %vm508 = vcmask 27648
          %v509 = vsel %vm508, %v507, 0.0
          %510 = vadd.xlane.f32.xlu0 %v509
          %v511 = vpop.xlane.xlu0 %510
          %v512 = vrot.slane %v509, 4
          %v513 = vadd.f32 %v509, %v512
          %v514 = vrot.slane %v513, 2
          %v515 = vadd.f32 %v513, %v514
          %v516 = vrot.slane %v515, 1
          %v517 = vadd.f32 %v515, %v516
          %v518 = vadd.f32 %v511, %v517
          %v519 = vmul.f32 %v499, 2.0
          %v520 = vsub.f32 %v518, %v519
          %v521 = vmax.f32 %v520, 0.0
          %vm522 = vcmp.gt.s32.totalorder %v505, %v503
          %v523 = vsel %vm522, %v521, 0.0
          %524 = vst.msk [vmem:[#allocation11] sm:$0xf] %vm508, %v523
        $region60: #{tpu_custom_call.1} parent=35 // pred_fallthru
          _
        // Predicated region
        $region61: #{tpu_custom_call.1} parent=35 // pred_check
          %p525 = pneg %p142
        $region62: #{tpu_custom_call.1} parent=35 // pred_check_branch
          %527 = sbr.rel (%p525) target = $region64
        $region63: #{tpu_custom_call.1} parent=35 // pred_region
          %s529 = ssub.s32 64, 64
          %530 = vsyncadd [#allocation5], %s529
          %s532 = sshll.u32 [#allocation11], 4
          %s533 = int_to_ptr.vmem [resolvable:$true] %s532
          %535 = dma.vmem_to_hbm [thread:$0]  %s533, 64, %s4, [#allocation5]
        $region64: #{tpu_custom_call.1} parent=35 // pred_fallthru
          _
        // Predicated region
        $region65: #{tpu_custom_call.1} parent=35 // pred_check
          %p536 = pneg %p142
        $region66: #{tpu_custom_call.1} parent=35 // pred_check_branch
          %538 = sbr.rel (%p536) target = $region68
        $region67: #{tpu_custom_call.1} parent=35 // pred_region
          %539 = dma.done [#allocation5], 64
        $region68: #{tpu_custom_call.1} parent=35 // pred_fallthru
          _
      $region36: #{tpu_custom_call.1} parent=5 // pred_fallthru
        _
      %p540 = scmp.le.s32.totalorder 2, %s20
      // Predicated region
      $region69: #{tpu_custom_call.1} parent=5 // pred_check
        %p541 = pneg %p540
      $region70: #{tpu_custom_call.1} parent=5 // pred_check_branch
        %543 = sbr.rel (%p541) target = $region72
      $region71: #{tpu_custom_call.1} parent=5 // pred_region
        %s544 = ssub.s32 %s20, 2
      $region72: #{tpu_custom_call.1} parent=5 // pred_fallthru
        _
    $region6: #{tpu_custom_call.1} parent=1 // loop_footer
      %s24 = sadd.s32 1, %s20
    $region7: #{tpu_custom_call.1} parent=1 // loop_footer_branch
      %19 = sbr.rel target = $region3
    $region8: #{tpu_custom_call.1} parent=1 // loop_exit
      _
    %545 = vsyncpa [#allocation4], 1
    %s546 = scalar_lea.sflag [#allocation4], 1
    %547 = vsyncpa %s546, 1
    %548 = vsyncpa [#allocation7], 1
    %s549 = scalar_lea.sflag [#allocation7], 1
    %550 = vsyncpa %s549, 1
    %551 = vsyncpa [#allocation10], 1
    %s552 = scalar_lea.sflag [#allocation10], 1
    %553 = vsyncpa %s552, 1
    %554 = vsyncpa [#allocation5], 1
    %s555 = scalar_lea.sflag [#allocation5], 1
    %556 = vsyncpa %s555, 1

</llo_original>
